<compile_context>
chip_gen: v6e
topology: v6e:2x2x1
jax: 0.10.0
libtpu: 0.0.40
codegen_flags: <defaults>
</compile_context>

<pallas_src>
import jax
import jax.numpy as jnp
import numpy as np
from jax.experimental import pallas as pl
from jax.experimental.pallas import tpu as pltpu

LAYER_DIMS = [2, 256, 128, 64, 32, 3]   # Linear(2,256) ... Linear(32,3)
N_LAYERS = len(LAYER_DIMS) - 1          # 5 linear layers


def autoencoder_kernel(x1_ref, x2_ref,
                       w1_ref, w2_ref, w3_ref, w4_ref, w5_ref,
                       b1_ref, b2_ref, b3_ref, b4_ref, b5_ref,
                       dist_ref):
    tile_n = x1_ref.shape[0]

    # Fuse the siamese passes: one (2*TILE_N, 2) block through the encoder.
    x = jnp.concatenate([x1_ref[...], x2_ref[...]], axis=0)

    # Layer 1: Linear(2, 256).  K=2 would waste >98% of the MXU contraction
    # depth, so do it as two VPU broadcast-FMAs instead.
    w1 = w1_ref[...]
    h = x[:, 0:1] * w1[0:1, :] + x[:, 1:2] * w1[1:2, :] + b1_ref[...]
    # nn.Dropout(0.2) -> identity at inference.

    # Linear(256,128) + ReLU
    h = jnp.dot(h, w2_ref[...], preferred_element_type=jnp.float32) + b2_ref[...]
    h = jnp.maximum(h, 0.0)
    # Linear(128,64) + ReLU
    h = jnp.dot(h, w3_ref[...], preferred_element_type=jnp.float32) + b3_ref[...]
    h = jnp.maximum(h, 0.0)
    # Linear(64,32) + ReLU
    h = jnp.dot(h, w4_ref[...], preferred_element_type=jnp.float32) + b4_ref[...]
    h = jnp.maximum(h, 0.0)
    # Linear(32,3)
    h = jnp.dot(h, w5_ref[...], preferred_element_type=jnp.float32) + b5_ref[...]

    out1 = h[:tile_n, :]          # embedding of x1 tile, (TILE_N, 3)
    out2 = h[tile_n:, :]          # embedding of x2 tile, (TILE_N, 3)
    d = out1 - out2
    # distance = sqrt(sum((out1 - out2)^2, dim=1)) -> (TILE_N, 1) column.
    # (Output is tiny; lane-dense rewrite only if writeback shows in a trace.)
    dist_ref[...] = jnp.sqrt(jnp.sum(d * d, axis=1, keepdims=True))


def autoencoder_forward(x1, x2, weights, biases, tile_n=None):
    """Returns pairwise distances of shape (N,), like the PyTorch forward."""
    n, f = x1.shape

    if tile_n is None:
        # 1024 rows/tile is in the sweet spot and fits comfortably on every
        # generation (dominant live buffer: 2*TILE_N*256*4 B = 2 MiB @ 1024).
        tile_n = min(1024, ((n + 7) // 8) * 8)

    n_pad = ((n + tile_n - 1) // tile_n) * tile_n
    if n_pad != n:
        pad = ((0, n_pad - n), (0, 0))
        x1 = jnp.pad(x1, pad)
        x2 = jnp.pad(x2, pad)
    num_tiles = n_pad // tile_n

    x_spec = pl.BlockSpec((tile_n, f), lambda i: (i, 0))

    def const_spec(shape):
        # Full-shape block, constant index -> stays resident in VMEM across
        # grid steps (no re-DMA of weights/biases).
        return pl.BlockSpec(shape, lambda i: (0, 0))

    in_specs = (
        [x_spec, x_spec]
        + [const_spec(w.shape) for w in weights]
        + [const_spec(b.shape) for b in biases]
    )
    out_spec = pl.BlockSpec((tile_n, 1), lambda i: (i, 0))

    flops_per_row = 2 * sum(LAYER_DIMS[i] * LAYER_DIMS[i + 1]
                            for i in range(N_LAYERS))
    cost = pl.CostEstimate(
        flops=2 * n_pad * flops_per_row,               # two encoder rows / pair
        transcendentals=n_pad,                          # sqrt per pair
        bytes_accessed=4 * (x1.size + x2.size + n_pad
                            + sum(w.size for w in weights)
                            + sum(b.size for b in biases)),
    )

    dist = pl.pallas_call(
        autoencoder_kernel,
        out_shape=jax.ShapeDtypeStruct((n_pad, 1), jnp.float32),
        grid=(num_tiles,),
        in_specs=in_specs,
        out_specs=out_spec,
        compiler_params=pltpu.CompilerParams(
            dimension_semantics=("parallel",),
        ),
        cost_estimate=cost,
    )(x1, x2, *weights, *biases)

    return dist[:n, 0]


def init_params(key):
    """PyTorch-style uniform(-1/sqrt(fan_in), 1/sqrt(fan_in)) init.

    Weights are stored pre-transposed as (in_features, out_features) so the
    kernel computes x @ W + b.
    """
    weights, biases = [], []
    for i in range(N_LAYERS):
        fan_in, fan_out = LAYER_DIMS[i], LAYER_DIMS[i + 1]
        key, kw, kb = jax.random.split(key, 3)
        bound = 1.0 / np.sqrt(fan_in)
        w = jax.random.uniform(kw, (fan_in, fan_out), jnp.float32, -bound, bound)
        b = jax.random.uniform(kb, (1, fan_out), jnp.float32, -bound, bound)
        weights.append(w)
        biases.append(b)
    return weights, biases


def reference_forward(x1, x2, weights, biases):
    def enc(x):
        h = x @ weights[0] + biases[0]          # Linear(2,256), dropout = id
        h = jnp.maximum(h @ weights[1] + biases[1], 0.0)
        h = jnp.maximum(h @ weights[2] + biases[2], 0.0)
        h = jnp.maximum(h @ weights[3] + biases[3], 0.0)
        h = h @ weights[4] + biases[4]
        return h
    d = enc(x1) - enc(x2)
    return jnp.sqrt(jnp.sum(d * d, axis=1))


if __name__ == "__main__":
    key = jax.random.PRNGKey(0)
    key, k1, k2 = jax.random.split(key, 3)

    N = 8  # small batch for the smoke test (tile_n adapts to 8)
    x1 = jax.random.normal(k1, (N, 2), jnp.float32)
    x2 = jax.random.normal(k2, (N, 2), jnp.float32)

    weights, biases = init_params(key)

    dist = autoencoder_forward(x1, x2, weights, biases)
    dist = jax.block_until_ready(dist)

    ref = jax.block_until_ready(reference_forward(x1, x2, weights, biases))
    np.testing.assert_allclose(np.asarray(dist), np.asarray(ref),
                               rtol=1e-5, atol=1e-5)
    print("KERNEL_OK")
</pallas_src>

<mosaic_0001>
module attributes {stable_mosaic.version = 11 : i64} {
  func.func @autoencoder_kernel(%arg0: i32, %arg1: memref<8x2xf32, #tpu.memory_space<vmem>>, %arg2: memref<8x2xf32, #tpu.memory_space<vmem>>, %arg3: memref<2x256xf32, #tpu.memory_space<vmem>>, %arg4: memref<256x128xf32, #tpu.memory_space<vmem>>, %arg5: memref<128x64xf32, #tpu.memory_space<vmem>>, %arg6: memref<64x32xf32, #tpu.memory_space<vmem>>, %arg7: memref<32x3xf32, #tpu.memory_space<vmem>>, %arg8: memref<1x256xf32, #tpu.memory_space<vmem>>, %arg9: memref<1x128xf32, #tpu.memory_space<vmem>>, %arg10: memref<1x64xf32, #tpu.memory_space<vmem>>, %arg11: memref<1x32xf32, #tpu.memory_space<vmem>>, %arg12: memref<1x3xf32, #tpu.memory_space<vmem>>, %arg13: memref<8x1xf32, #tpu.memory_space<vmem>>) attributes {dimension_semantics = [#tpu.dimension_semantics<parallel>], iteration_bounds = array<i64: 1>, scalar_prefetch = 0 : i64, scratch_operands = 0 : i64, tpu.core_type = #tpu.core_type<tc>, window_params = [{transform_indices = @transform_0, window_bounds = array<i64: 8, 2>}, {transform_indices = @transform_1, window_bounds = array<i64: 8, 2>}, {pipeline_mode = #tpu.pipeline_mode<synchronous>, transform_indices = @transform_2, window_bounds = array<i64: 2, 256>}, {pipeline_mode = #tpu.pipeline_mode<synchronous>, transform_indices = @transform_3, window_bounds = array<i64: 256, 128>}, {pipeline_mode = #tpu.pipeline_mode<synchronous>, transform_indices = @transform_4, window_bounds = array<i64: 128, 64>}, {pipeline_mode = #tpu.pipeline_mode<synchronous>, transform_indices = @transform_5, window_bounds = array<i64: 64, 32>}, {pipeline_mode = #tpu.pipeline_mode<synchronous>, transform_indices = @transform_6, window_bounds = array<i64: 32, 3>}, {pipeline_mode = #tpu.pipeline_mode<synchronous>, transform_indices = @transform_7, window_bounds = array<i64: 1, 256>}, {pipeline_mode = #tpu.pipeline_mode<synchronous>, transform_indices = @transform_8, window_bounds = array<i64: 1, 128>}, {pipeline_mode = #tpu.pipeline_mode<synchronous>, transform_indices = @transform_9, window_bounds = array<i64: 1, 64>}, {pipeline_mode = #tpu.pipeline_mode<synchronous>, transform_indices = @transform_10, window_bounds = array<i64: 1, 32>}, {pipeline_mode = #tpu.pipeline_mode<synchronous>, transform_indices = @transform_11, window_bounds = array<i64: 1, 3>}, {transform_indices = @transform_12, window_bounds = array<i64: 8, 1>}]} {
    %c0 = arith.constant 0 : index
    %c0_0 = arith.constant 0 : index
    %0 = vector.load %arg1[%c0, %c0_0] : memref<8x2xf32, #tpu.memory_space<vmem>>, vector<8x2xf32>
    %c0_1 = arith.constant 0 : index
    %c0_2 = arith.constant 0 : index
    %1 = vector.load %arg2[%c0_1, %c0_2] : memref<8x2xf32, #tpu.memory_space<vmem>>, vector<8x2xf32>
    %2 = tpu.concatenate %0, %1 in 0 : vector<8x2xf32>, vector<8x2xf32> -> vector<16x2xf32>
    %c0_3 = arith.constant 0 : index
    %c0_4 = arith.constant 0 : index
    %3 = vector.load %arg3[%c0_3, %c0_4] : memref<2x256xf32, #tpu.memory_space<vmem>>, vector<2x256xf32>
    %4 = vector.extract_strided_slice %2 {offsets = [0, 0], sizes = [16, 1], strides = [1, 1]} : vector<16x2xf32> to vector<16x1xf32>
    %5 = vector.extract_strided_slice %3 {offsets = [0, 0], sizes = [1, 256], strides = [1, 1]} : vector<2x256xf32> to vector<1x256xf32>
    %6 = vector.broadcast %4 : vector<16x1xf32> to vector<16x256xf32>
    %7 = vector.broadcast %5 : vector<1x256xf32> to vector<16x256xf32>
    %8 = arith.mulf %6, %7 : vector<16x256xf32>
    %9 = vector.extract_strided_slice %2 {offsets = [0, 1], sizes = [16, 1], strides = [1, 1]} : vector<16x2xf32> to vector<16x1xf32>
    %10 = vector.extract_strided_slice %3 {offsets = [1, 0], sizes = [1, 256], strides = [1, 1]} : vector<2x256xf32> to vector<1x256xf32>
    %11 = vector.broadcast %9 : vector<16x1xf32> to vector<16x256xf32>
    %12 = vector.broadcast %10 : vector<1x256xf32> to vector<16x256xf32>
    %13 = arith.mulf %11, %12 : vector<16x256xf32>
    %14 = arith.addf %8, %13 : vector<16x256xf32>
    %c0_5 = arith.constant 0 : index
    %c0_6 = arith.constant 0 : index
    %15 = vector.load %arg8[%c0_5, %c0_6] : memref<1x256xf32, #tpu.memory_space<vmem>>, vector<1x256xf32>
    %16 = vector.broadcast %15 : vector<1x256xf32> to vector<16x256xf32>
    %17 = arith.addf %14, %16 : vector<16x256xf32>
    %c0_7 = arith.constant 0 : index
    %c0_8 = arith.constant 0 : index
    %18 = vector.load %arg4[%c0_7, %c0_8] : memref<256x128xf32, #tpu.memory_space<vmem>>, vector<256x128xf32>
    %cst = arith.constant dense<0.000000e+00> : vector<16x128xf32>
    %19 = tpu.matmul %17, %18, %cst {dimension_numbers = #tpu.dot_dimension_numbers<[1], [0], [0], [1], [0, 0, 1, 1], [], []>} : vector<16x256xf32>, vector<256x128xf32>, vector<16x128xf32> -> vector<16x128xf32>
    %c0_9 = arith.constant 0 : index
    %c0_10 = arith.constant 0 : index
    %20 = vector.load %arg9[%c0_9, %c0_10] : memref<1x128xf32, #tpu.memory_space<vmem>>, vector<1x128xf32>
    %21 = vector.broadcast %20 : vector<1x128xf32> to vector<16x128xf32>
    %22 = arith.addf %19, %21 : vector<16x128xf32>
    %cst_11 = arith.constant 0.000000e+00 : f32
    %23 = vector.broadcast %cst_11 : f32 to vector<16x128xf32>
    %24 = arith.maximumf %22, %23 : vector<16x128xf32>
    %c0_12 = arith.constant 0 : index
    %c0_13 = arith.constant 0 : index
    %25 = vector.load %arg5[%c0_12, %c0_13] : memref<128x64xf32, #tpu.memory_space<vmem>>, vector<128x64xf32>
    %cst_14 = arith.constant dense<0.000000e+00> : vector<16x64xf32>
    %26 = tpu.matmul %24, %25, %cst_14 {dimension_numbers = #tpu.dot_dimension_numbers<[1], [0], [0], [1], [0, 0, 1, 1], [], []>} : vector<16x128xf32>, vector<128x64xf32>, vector<16x64xf32> -> vector<16x64xf32>
    %c0_15 = arith.constant 0 : index
    %c0_16 = arith.constant 0 : index
    %27 = vector.load %arg10[%c0_15, %c0_16] : memref<1x64xf32, #tpu.memory_space<vmem>>, vector<1x64xf32>
    %28 = vector.broadcast %27 : vector<1x64xf32> to vector<16x64xf32>
    %29 = arith.addf %26, %28 : vector<16x64xf32>
    %cst_17 = arith.constant 0.000000e+00 : f32
    %30 = vector.broadcast %cst_17 : f32 to vector<16x64xf32>
    %31 = arith.maximumf %29, %30 : vector<16x64xf32>
    %c0_18 = arith.constant 0 : index
    %c0_19 = arith.constant 0 : index
    %32 = vector.load %arg6[%c0_18, %c0_19] : memref<64x32xf32, #tpu.memory_space<vmem>>, vector<64x32xf32>
    %cst_20 = arith.constant dense<0.000000e+00> : vector<16x32xf32>
    %33 = tpu.matmul %31, %32, %cst_20 {dimension_numbers = #tpu.dot_dimension_numbers<[1], [0], [0], [1], [0, 0, 1, 1], [], []>} : vector<16x64xf32>, vector<64x32xf32>, vector<16x32xf32> -> vector<16x32xf32>
    %c0_21 = arith.constant 0 : index
    %c0_22 = arith.constant 0 : index
    %34 = vector.load %arg11[%c0_21, %c0_22] : memref<1x32xf32, #tpu.memory_space<vmem>>, vector<1x32xf32>
    %35 = vector.broadcast %34 : vector<1x32xf32> to vector<16x32xf32>
    %36 = arith.addf %33, %35 : vector<16x32xf32>
    %cst_23 = arith.constant 0.000000e+00 : f32
    %37 = vector.broadcast %cst_23 : f32 to vector<16x32xf32>
    %38 = arith.maximumf %36, %37 : vector<16x32xf32>
    %c0_24 = arith.constant 0 : index
    %c0_25 = arith.constant 0 : index
    %39 = vector.load %arg7[%c0_24, %c0_25] : memref<32x3xf32, #tpu.memory_space<vmem>>, vector<32x3xf32>
    %cst_26 = arith.constant dense<0.000000e+00> : vector<16x3xf32>
    %40 = tpu.matmul %38, %39, %cst_26 {dimension_numbers = #tpu.dot_dimension_numbers<[1], [0], [0], [1], [0, 0, 1, 1], [], []>} : vector<16x32xf32>, vector<32x3xf32>, vector<16x3xf32> -> vector<16x3xf32>
    %c0_27 = arith.constant 0 : index
    %c0_28 = arith.constant 0 : index
    %41 = vector.load %arg12[%c0_27, %c0_28] : memref<1x3xf32, #tpu.memory_space<vmem>>, vector<1x3xf32>
    %42 = vector.broadcast %41 : vector<1x3xf32> to vector<16x3xf32>
    %43 = arith.addf %40, %42 : vector<16x3xf32>
    %44 = vector.extract_strided_slice %43 {offsets = [0, 0], sizes = [8, 3], strides = [1, 1]} : vector<16x3xf32> to vector<8x3xf32>
    %45 = vector.extract_strided_slice %43 {offsets = [8, 0], sizes = [8, 3], strides = [1, 1]} : vector<16x3xf32> to vector<8x3xf32>
    %46 = arith.subf %44, %45 : vector<8x3xf32>
    %47 = arith.mulf %46, %46 : vector<8x3xf32>
    %cst_29 = arith.constant dense<0.000000e+00> : vector<8xf32>
    %48 = vector.multi_reduction <add>, %47, %cst_29 [1] : vector<8x3xf32> to vector<8xf32>
    %49 = vector.shape_cast %48 : vector<8xf32> to vector<8x1xf32>
    %50 = math.sqrt %49 : vector<8x1xf32>
    %c0_30 = arith.constant 0 : index
    %c0_31 = arith.constant 0 : index
    %51 = vector.load %arg13[%c0_30, %c0_31] : memref<8x1xf32, #tpu.memory_space<vmem>>, vector<8x1xf32>
    tpu.vector_store %arg13[%c0_30, %c0_31], %50 {strides = array<i32>} : memref<8x1xf32, #tpu.memory_space<vmem>>, vector<8x1xf32>,
    return
  }
  func.func @transform_0(%arg0: i32) -> (i32, i32) {
    %c0_i32 = arith.constant 0 : i32
    %c0_i32_0 = arith.constant 0 : i32
    return %arg0, %c0_i32 : i32, i32
  }
  func.func @transform_1(%arg0: i32) -> (i32, i32) {
    %c0_i32 = arith.constant 0 : i32
    %c0_i32_0 = arith.constant 0 : i32
    return %arg0, %c0_i32 : i32, i32
  }
  func.func @transform_2(%arg0: i32) -> (i32, i32) {
    %c0_i32 = arith.constant 0 : i32
    %c0_i32_0 = arith.constant 0 : i32
    %c0_i32_1 = arith.constant 0 : i32
    return %c0_i32, %c0_i32_0 : i32, i32
  }
  func.func @transform_3(%arg0: i32) -> (i32, i32) {
    %c0_i32 = arith.constant 0 : i32
    %c0_i32_0 = arith.constant 0 : i32
    %c0_i32_1 = arith.constant 0 : i32
    return %c0_i32, %c0_i32_0 : i32, i32
  }
  func.func @transform_4(%arg0: i32) -> (i32, i32) {
    %c0_i32 = arith.constant 0 : i32
    %c0_i32_0 = arith.constant 0 : i32
    %c0_i32_1 = arith.constant 0 : i32
    return %c0_i32, %c0_i32_0 : i32, i32
  }
  func.func @transform_5(%arg0: i32) -> (i32, i32) {
    %c0_i32 = arith.constant 0 : i32
    %c0_i32_0 = arith.constant 0 : i32
    %c0_i32_1 = arith.constant 0 : i32
    return %c0_i32, %c0_i32_0 : i32, i32
  }
  func.func @transform_6(%arg0: i32) -> (i32, i32) {
    %c0_i32 = arith.constant 0 : i32
    %c0_i32_0 = arith.constant 0 : i32
    %c0_i32_1 = arith.constant 0 : i32
    return %c0_i32, %c0_i32_0 : i32, i32
  }
  func.func @transform_7(%arg0: i32) -> (i32, i32) {
    %c0_i32 = arith.constant 0 : i32
    %c0_i32_0 = arith.constant 0 : i32
    %c0_i32_1 = arith.constant 0 : i32
    return %c0_i32, %c0_i32_0 : i32, i32
  }
  func.func @transform_8(%arg0: i32) -> (i32, i32) {
    %c0_i32 = arith.constant 0 : i32
    %c0_i32_0 = arith.constant 0 : i32
    %c0_i32_1 = arith.constant 0 : i32
    return %c0_i32, %c0_i32_0 : i32, i32
  }
  func.func @transform_9(%arg0: i32) -> (i32, i32) {
    %c0_i32 = arith.constant 0 : i32
    %c0_i32_0 = arith.constant 0 : i32
    %c0_i32_1 = arith.constant 0 : i32
    return %c0_i32, %c0_i32_0 : i32, i32
  }
  func.func @transform_10(%arg0: i32) -> (i32, i32) {
    %c0_i32 = arith.constant 0 : i32
    %c0_i32_0 = arith.constant 0 : i32
    %c0_i32_1 = arith.constant 0 : i32
    return %c0_i32, %c0_i32_0 : i32, i32
  }
  func.func @transform_11(%arg0: i32) -> (i32, i32) {
    %c0_i32 = arith.constant 0 : i32
    %c0_i32_0 = arith.constant 0 : i32
    %c0_i32_1 = arith.constant 0 : i32
    return %c0_i32, %c0_i32_0 : i32, i32
  }
  func.func @transform_12(%arg0: i32) -> (i32, i32) {
    %c0_i32 = arith.constant 0 : i32
    %c0_i32_0 = arith.constant 0 : i32
    return %arg0, %c0_i32 : i32, i32
  }
}

</mosaic_0001>

<llo_original>
// kernel: tpu_custom_call.1
$region0: #{tpu_custom_call.1}
  #allocation0 [shape = 'u32[]', space=smem, size = 0x4, offset = 0x4, fixed_abs, tag = 'smem constant byte address 0x4 - core index']
  #allocation1 [shape = 'u32[144,128]{1,0:T(1,128)}', space=vmem, size = 0x12000, scoped, tag = 'internal scratch']
  %s0 = inlined_call_operand.vmem [shape: f32[8,2], index: 0, kind: input, shape index: {}]
  %s1 = inlined_call_operand.vmem [shape: f32[8,2], index: 1, kind: input, shape index: {}]
  %s2 = inlined_call_operand.hbm [shape: f32[2,256], index: 2, kind: input, shape index: {}]
  %s3 = inlined_call_operand.vmem [shape: f32[256,128], index: 3, kind: input, shape index: {}]
  %s4 = inlined_call_operand.vmem [shape: f32[128,64], index: 4, kind: input, shape index: {}]
  %s5 = inlined_call_operand.vmem [shape: f32[64,32], index: 5, kind: input, shape index: {}]
  %s6 = inlined_call_operand.vmem [shape: f32[32,3], index: 6, kind: input, shape index: {}]
  %s7 = inlined_call_operand.vmem [shape: f32[1,256], index: 7, kind: input, shape index: {}]
  %s8 = inlined_call_operand.vmem [shape: f32[1,128], index: 8, kind: input, shape index: {}]
  %s9 = inlined_call_operand.vmem [shape: f32[1,64], index: 9, kind: input, shape index: {}]
  %s10 = inlined_call_operand.vmem [shape: f32[1,32], index: 10, kind: input, shape index: {}]
  %s11 = inlined_call_operand.vmem [shape: f32[1,3], index: 11, kind: input, shape index: {}]
  %s12 = inlined_call_operand.vmem [shape: f32[8,1], index: 12, kind: output, shape index: {}]
  %s13 = sld [smem:[#allocation0]]
  $region62: #{tpu_custom_call.1} parent=0
    _
  %s15 = ssub.s32 1, %s13
  %s16 = scalar_select 0, %s15, %s13
  $region1: #{tpu_custom_call.1} parent=0
    #allocation2 [shape = 'u8[2048]{0}', space=vmem, size = 0x800, scoped, tag = 'input window, operand 2, single buffered']
    #allocation3 [shape = 's32[1]{0}', space=sflag, size = 0x4, scoped, tag = 'scoped memory for tpu_custom_call.1']
    %17 = vsyncpa [#allocation3], 0
    // Predicated region
    $region2: #{tpu_custom_call.1} parent=1 // pred_check
      _
    $region3: #{tpu_custom_call.1} parent=1 // pred_check_branch
      %19 = sbr.rel (0) target = $region5
    $region4: #{tpu_custom_call.1} parent=1 // pred_region
      _
    $region5: #{tpu_custom_call.1} parent=1 // pred_fallthru
      _
    // Predicated region
    $region6: #{tpu_custom_call.1} parent=1 // pred_check
      _
    $region7: #{tpu_custom_call.1} parent=1 // pred_check_branch
      %21 = sbr.rel (0) target = $region9
    $region8: #{tpu_custom_call.1} parent=1 // pred_region
      _
    $region9: #{tpu_custom_call.1} parent=1 // pred_fallthru
      _
    // Predicated region
    $region10: #{tpu_custom_call.1} parent=1 // pred_check
      _
    $region11: #{tpu_custom_call.1} parent=1 // pred_check_branch
      %23 = sbr.rel (0) target = $region13
    $region12: #{tpu_custom_call.1} parent=1 // pred_region
      %s25 = ssub.s32 64, 64
      %26 = vsyncadd [#allocation3], %s25
      %s28 = sshll.u32 [#allocation2], 4
      %s29 = int_to_ptr.vmem [resolvable:$true] %s28
      %31 = dma.hbm_to_vmem [thread:$0]  %s2, 64, %s29, [#allocation3]
    $region13: #{tpu_custom_call.1} parent=1 // pred_fallthru
      _
    // Predicated region
    $region14: #{tpu_custom_call.1} parent=1 // pred_check
      _
    $region15: #{tpu_custom_call.1} parent=1 // pred_check_branch
      %33 = sbr.rel (0) target = $region17
    $region16: #{tpu_custom_call.1} parent=1 // pred_region
      _
    $region17: #{tpu_custom_call.1} parent=1 // pred_fallthru
      _
    // Predicated region
    $region18: #{tpu_custom_call.1} parent=1 // pred_check
      _
    $region19: #{tpu_custom_call.1} parent=1 // pred_check_branch
      %35 = sbr.rel (0) target = $region21
    $region20: #{tpu_custom_call.1} parent=1 // pred_region
      _
    $region21: #{tpu_custom_call.1} parent=1 // pred_fallthru
      _
    // Predicated region
    $region22: #{tpu_custom_call.1} parent=1 // pred_check
      _
    $region23: #{tpu_custom_call.1} parent=1 // pred_check_branch
      %37 = sbr.rel (0) target = $region25
    $region24: #{tpu_custom_call.1} parent=1 // pred_region
      _
    $region25: #{tpu_custom_call.1} parent=1 // pred_fallthru
      _
    // Predicated region
    $region26: #{tpu_custom_call.1} parent=1 // pred_check
      _
    $region27: #{tpu_custom_call.1} parent=1 // pred_check_branch
      %39 = sbr.rel (0) target = $region29
    $region28: #{tpu_custom_call.1} parent=1 // pred_region
      _
    $region29: #{tpu_custom_call.1} parent=1 // pred_fallthru
      _
    // Predicated region
    $region30: #{tpu_custom_call.1} parent=1 // pred_check
      _
    $region31: #{tpu_custom_call.1} parent=1 // pred_check_branch
      %41 = sbr.rel (0) target = $region33
    $region32: #{tpu_custom_call.1} parent=1 // pred_region
      _
    $region33: #{tpu_custom_call.1} parent=1 // pred_fallthru
      _
    // Predicated region
    $region34: #{tpu_custom_call.1} parent=1 // pred_check
      _
    $region35: #{tpu_custom_call.1} parent=1 // pred_check_branch
      %43 = sbr.rel (0) target = $region37
    $region36: #{tpu_custom_call.1} parent=1 // pred_region
      _
    $region37: #{tpu_custom_call.1} parent=1 // pred_fallthru
      _
    // Predicated region
    $region38: #{tpu_custom_call.1} parent=1 // pred_check
      _
    $region39: #{tpu_custom_call.1} parent=1 // pred_check_branch
      %45 = sbr.rel (0) target = $region41
    $region40: #{tpu_custom_call.1} parent=1 // pred_region
      _
    $region41: #{tpu_custom_call.1} parent=1 // pred_fallthru
      _
    // Predicated region
    $region42: #{tpu_custom_call.1} parent=1 // pred_check
      _
    $region43: #{tpu_custom_call.1} parent=1 // pred_check_branch
      %47 = sbr.rel (0) target = $region45
    $region44: #{tpu_custom_call.1} parent=1 // pred_region
      _
    $region45: #{tpu_custom_call.1} parent=1 // pred_fallthru
      _
    // Predicated region
    $region46: #{tpu_custom_call.1} parent=1 // pred_check
      _
    $region47: #{tpu_custom_call.1} parent=1 // pred_check_branch
      %49 = sbr.rel (0) target = $region49
    $region48: #{tpu_custom_call.1} parent=1 // pred_region
      _
    $region49: #{tpu_custom_call.1} parent=1 // pred_fallthru
      _
    // Predicated region
    $region50: #{tpu_custom_call.1} parent=1 // pred_check
      _
    $region51: #{tpu_custom_call.1} parent=1 // pred_check_branch
      %51 = sbr.rel (0) target = $region53
    $region52: #{tpu_custom_call.1} parent=1 // pred_region
      %52 = dma.done [#allocation3], 64
    $region53: #{tpu_custom_call.1} parent=1 // pred_fallthru
      _
    %v53 = vld [vmem:[%s0] sm:$0xff]
    %v54 = vld [vmem:[%s1] sm:$0xff]
    %v55 = vld [vmem:[#allocation2] sm:$0xf]
    %57 = vset.pattern.permute.xlu0 0
    %58 = vperm.xlu0 %57, %v53
    %v59 = vpop.permute.xlu0 %58
    %62 = vset.pattern.permute.xlu0 0
    %63 = vperm.xlu0 %62, %v54
    %v64 = vpop.permute.xlu0 %63
    %v67 = vlaneseq
    %v68 = vshrl.u32 %v67, 7
    %v69 = vsub.s32 0, %v68
    %v70 = vrot.slane %v55, %v69
    %v71 = vlaneseq
    %v72 = vshrl.u32 %v71, 7
    %v73 = vsub.s32 2, %v72
    %v74 = vrot.slane %v55, %v73
    %v77 = vlaneseq
    %v78 = vshrl.u32 %v77, 7
    %v79 = vsub.s32 0, %v78
    %v80 = vrot.slane %v70, %v79
    %v81 = vlaneseq
    %v82 = vshrl.u32 %v81, 7
    %v83 = vsub.s32 0, %v82
    %v84 = vrot.slane %v74, %v83
    %v85 = vmul.f32 %v59, %v80
    %v86 = vmul.f32 %v59, %v84
    %v87 = vmul.f32 %v64, %v80
    %v88 = vmul.f32 %v64, %v84
    %89 = vset.pattern.permute.xlu0 1
    %90 = vperm.xlu0 %89, %v53
    %v91 = vpop.permute.xlu0 %90
    %93 = vset.pattern.permute.xlu0 1
    %94 = vperm.xlu0 %93, %v54
    %v95 = vpop.permute.xlu0 %94
    %v97 = vlaneseq
    %v98 = vshrl.u32 %v97, 7
    %v99 = vsub.s32 1, %v98
    %v100 = vrot.slane %v55, %v99
    %v101 = vlaneseq
    %v102 = vshrl.u32 %v101, 7
    %v103 = vsub.s32 3, %v102
    %v104 = vrot.slane %v55, %v103
    %v107 = vlaneseq
    %v108 = vshrl.u32 %v107, 7
    %v109 = vsub.s32 1, %v108
    %v110 = vrot.slane %v100, %v109
    %v111 = vlaneseq
    %v112 = vshrl.u32 %v111, 7
    %v113 = vsub.s32 1, %v112
    %v114 = vrot.slane %v104, %v113
    %v115 = vmul.f32 %v91, %v110
    %v116 = vmul.f32 %v91, %v114
    %v117 = vmul.f32 %v95, %v110
    %v118 = vmul.f32 %v95, %v114
    %v119 = vadd.f32 %v85, %v115
    %v120 = vadd.f32 %v86, %v116
    %v121 = vadd.f32 %v87, %v117
    %v122 = vadd.f32 %v88, %v118
    %v123 = vld [vmem:[%s7] sm:$0x3]
    %v125 = vlaneseq
    %v126 = vshrl.u32 %v125, 7
    %v127 = vsub.s32 0, %v126
    %v128 = vrot.slane %v123, %v127
    %v129 = vlaneseq
    %v130 = vshrl.u32 %v129, 7
    %v131 = vsub.s32 1, %v130
    %v132 = vrot.slane %v123, %v131
    %v135 = vadd.f32 %v119, %v128
    %v136 = vadd.f32 %v120, %v132
    %v137 = vadd.f32 %v121, %v128
    %v138 = vadd.f32 %v122, %v132
    %v139 = vld [vmem:[%s3] sm:$0xff]
    %v140 = vld [vmem:[%s3 + $0x8] sm:$0xff]
    %v141 = vld [vmem:[%s3 + $0x10] sm:$0xff]
    %v142 = vld [vmem:[%s3 + $0x18] sm:$0xff]
    %v143 = vld [vmem:[%s3 + $0x20] sm:$0xff]
    %v144 = vld [vmem:[%s3 + $0x28] sm:$0xff]
    %v145 = vld [vmem:[%s3 + $0x30] sm:$0xff]
    %v146 = vld [vmem:[%s3 + $0x38] sm:$0xff]
    %v147 = vld [vmem:[%s3 + $0x40] sm:$0xff]
    %v148 = vld [vmem:[%s3 + $0x48] sm:$0xff]
    %v149 = vld [vmem:[%s3 + $0x50] sm:$0xff]
    %v150 = vld [vmem:[%s3 + $0x58] sm:$0xff]
    %v151 = vld [vmem:[%s3 + $0x60] sm:$0xff]
    %v152 = vld [vmem:[%s3 + $0x68] sm:$0xff]
    %v153 = vld [vmem:[%s3 + $0x70] sm:$0xff]
    %v154 = vld [vmem:[%s3 + $0x78] sm:$0xff]
    %v155 = vld [vmem:[%s3 + $0x80] sm:$0xff]
    %v156 = vld [vmem:[%s3 + $0x88] sm:$0xff]
    %v157 = vld [vmem:[%s3 + $0x90] sm:$0xff]
    %v158 = vld [vmem:[%s3 + $0x98] sm:$0xff]
    %v159 = vld [vmem:[%s3 + $0xa0] sm:$0xff]
    %v160 = vld [vmem:[%s3 + $0xa8] sm:$0xff]
    %v161 = vld [vmem:[%s3 + $0xb0] sm:$0xff]
    %v162 = vld [vmem:[%s3 + $0xb8] sm:$0xff]
    %v163 = vld [vmem:[%s3 + $0xc0] sm:$0xff]
    %v164 = vld [vmem:[%s3 + $0xc8] sm:$0xff]
    %v165 = vld [vmem:[%s3 + $0xd0] sm:$0xff]
    %v166 = vld [vmem:[%s3 + $0xd8] sm:$0xff]
    %v167 = vld [vmem:[%s3 + $0xe0] sm:$0xff]
    %v168 = vld [vmem:[%s3 + $0xe8] sm:$0xff]
    %v169 = vld [vmem:[%s3 + $0xf0] sm:$0xff]
    %v170 = vld [vmem:[%s3 + $0xf8] sm:$0xff]
    %v171 = vld [vmem:[%s8] sm:$0x1]
    %v173 = vlaneseq
    %v174 = vshrl.u32 %v173, 7
    %v175 = vsub.s32 0, %v174
    %v176 = vrot.slane %v171, %v175
    %178 = vmatprep.subr.mxu0 0.0
    %179 = vmatpush1.msra.mxu0 %v154
    %180 = vmatprep.subr.mxu0 0.0
    %181 = vmatpush1.msra.mxu0 %v153
    %182 = vmatprep.subr.mxu0 0.0
    %183 = vmatpush1.msra.mxu0 %v152
    %184 = vmatprep.subr.mxu0 0.0
    %185 = vmatpush1.msra.mxu0 %v151
    %186 = vmatprep.subr.mxu0 0.0
    %187 = vmatpush1.msra.mxu0 %v150
    %188 = vmatprep.subr.mxu0 0.0
    %189 = vmatpush1.msra.mxu0 %v149
    %190 = vmatprep.subr.mxu0 0.0
    %191 = vmatpush1.msra.mxu0 %v148
    %192 = vmatprep.subr.mxu0 0.0
    %193 = vmatpush1.msra.mxu0 %v147
    %194 = vmatprep.subr.mxu0 0.0
    %195 = vmatpush1.msra.mxu0 %v146
    %196 = vmatprep.subr.mxu0 0.0
    %197 = vmatpush1.msra.mxu0 %v145
    %198 = vmatprep.subr.mxu0 0.0
    %199 = vmatpush1.msra.mxu0 %v144
    %200 = vmatprep.subr.mxu0 0.0
    %201 = vmatpush1.msra.mxu0 %v143
    %202 = vmatprep.subr.mxu0 0.0
    %203 = vmatpush1.msra.mxu0 %v142
    %204 = vmatprep.subr.mxu0 0.0
    %205 = vmatpush1.msra.mxu0 %v141
    %206 = vmatprep.subr.mxu0 0.0
    %207 = vmatpush1.msra.mxu0 %v140
    %208 = vmatprep.subr.mxu0 0.0
    %209 = vmatpush1.msra.mxu0 %v139
    %210 = vmatprep.subr.mxu0 0.0
    %211 = vmatpush2.msra.mxu0 %v170
    %212 = vmatprep.subr.mxu0 0.0
    %213 = vmatpush2.msra.mxu0 %v169
    %214 = vmatprep.subr.mxu0 0.0
    %215 = vmatpush2.msra.mxu0 %v168
    %216 = vmatprep.subr.mxu0 0.0
    %217 = vmatpush2.msra.mxu0 %v167
    %218 = vmatprep.subr.mxu0 0.0
    %219 = vmatpush2.msra.mxu0 %v166
    %220 = vmatprep.subr.mxu0 0.0
    %221 = vmatpush2.msra.mxu0 %v165
    %222 = vmatprep.subr.mxu0 0.0
    %223 = vmatpush2.msra.mxu0 %v164
    %224 = vmatprep.subr.mxu0 0.0
    %225 = vmatpush2.msra.mxu0 %v163
    %226 = vmatprep.subr.mxu0 0.0
    %227 = vmatpush2.msra.mxu0 %v162
    %228 = vmatprep.subr.mxu0 0.0
    %229 = vmatpush2.msra.mxu0 %v161
    %230 = vmatprep.subr.mxu0 0.0
    %231 = vmatpush2.msra.mxu0 %v160
    %232 = vmatprep.subr.mxu0 0.0
    %233 = vmatpush2.msra.mxu0 %v159
    %234 = vmatprep.subr.mxu0 0.0
    %235 = vmatpush2.msra.mxu0 %v158
    %236 = vmatprep.subr.mxu0 0.0
    %237 = vmatpush2.msra.mxu0 %v157
    %238 = vmatprep.subr.mxu0 0.0
    %239 = vmatpush2.msra.mxu0 %v156
    %240 = vmatprep.subr.mxu0 0.0
    %241 = vmatpush2.msra.mxu0 %v155
    %242 = vmatprep.mubr.f32.mxu0 %v136
    %243 = vmatmul.mubr.f32.gmra.mxu0 %v135
    %v244 = vpop.f32.mrf.mxu0
    %v245 = vadd.f32 %v176, %v244
    %v246 = vpop.f32.mrf.mxu0
    %247 = vmatprep.mubr.f32.mxu0 %v138
    %248 = vmatmul.mubr.f32.gmra.mxu0 %v137
    %v249 = vpop.f32.mrf.mxu0
    %v250 = vadd.f32 %v176, %v249
    %v251 = vpop.f32.mrf.mxu0
    %252 = vdwg.mxu0
    %v253 = vmax.f32 %v245, 0.0
    %v254 = vmax.f32 %v250, 0.0
    %v255 = vld [vmem:[%s4] sm:$0xff]
    %v256 = vld [vmem:[%s4 + $0x8] sm:$0xff]
    %v257 = vld [vmem:[%s4 + $0x10] sm:$0xff]
    %v258 = vld [vmem:[%s4 + $0x18] sm:$0xff]
    %v259 = vld [vmem:[%s4 + $0x20] sm:$0xff]
    %v260 = vld [vmem:[%s4 + $0x28] sm:$0xff]
    %v261 = vld [vmem:[%s4 + $0x30] sm:$0xff]
    %v262 = vld [vmem:[%s4 + $0x38] sm:$0xff]
    %v263 = vld [vmem:[%s4 + $0x40] sm:$0xff]
    %v264 = vld [vmem:[%s4 + $0x48] sm:$0xff]
    %v265 = vld [vmem:[%s4 + $0x50] sm:$0xff]
    %v266 = vld [vmem:[%s4 + $0x58] sm:$0xff]
    %v267 = vld [vmem:[%s4 + $0x60] sm:$0xff]
    %v268 = vld [vmem:[%s4 + $0x68] sm:$0xff]
    %v269 = vld [vmem:[%s4 + $0x70] sm:$0xff]
    %v270 = vld [vmem:[%s4 + $0x78] sm:$0xff]
    %v271 = vld [vmem:[%s9] sm:$0x1]
    %v273 = vlaneseq
    %v274 = vshrl.u32 %v273, 7
    %v275 = vsub.s32 0, %v274
    %v276 = vrot.slane %v271, %v275
    %278 = vmatprep.subr.mxu0 0.0
    %279 = vmatpush1.msra.mxu0 %v270
    %280 = vmatprep.subr.mxu0 0.0
    %281 = vmatpush1.msra.mxu0 %v269
    %282 = vmatprep.subr.mxu0 0.0
    %283 = vmatpush1.msra.mxu0 %v268
    %284 = vmatprep.subr.mxu0 0.0
    %285 = vmatpush1.msra.mxu0 %v267
    %286 = vmatprep.subr.mxu0 0.0
    %287 = vmatpush1.msra.mxu0 %v266
    %288 = vmatprep.subr.mxu0 0.0
    %289 = vmatpush1.msra.mxu0 %v265
    %290 = vmatprep.subr.mxu0 0.0
    %291 = vmatpush1.msra.mxu0 %v264
    %292 = vmatprep.subr.mxu0 0.0
    %293 = vmatpush1.msra.mxu0 %v263
    %294 = vmatprep.subr.mxu0 0.0
    %295 = vmatpush1.msra.mxu0 %v262
    %296 = vmatprep.subr.mxu0 0.0
    %297 = vmatpush1.msra.mxu0 %v261
    %298 = vmatprep.subr.mxu0 0.0
    %299 = vmatpush1.msra.mxu0 %v260
    %300 = vmatprep.subr.mxu0 0.0
    %301 = vmatpush1.msra.mxu0 %v259
    %302 = vmatprep.subr.mxu0 0.0
    %303 = vmatpush1.msra.mxu0 %v258
    %304 = vmatprep.subr.mxu0 0.0
    %305 = vmatpush1.msra.mxu0 %v257
    %306 = vmatprep.subr.mxu0 0.0
    %307 = vmatpush1.msra.mxu0 %v256
    %308 = vmatprep.subr.mxu0 0.0
    %309 = vmatpush1.msra.mxu0 %v255
    %310 = vmatprep.subr.mxu0 0.0
    %311 = vmatpush2.msra.mxu0 0.0
    %312 = vmatprep.subr.mxu0 0.0
    %313 = vmatpush2.msra.mxu0 0.0
    %314 = vmatprep.subr.mxu0 0.0
    %315 = vmatpush2.msra.mxu0 0.0
    %316 = vmatprep.subr.mxu0 0.0
    %317 = vmatpush2.msra.mxu0 0.0
    %318 = vmatprep.subr.mxu0 0.0
    %319 = vmatpush2.msra.mxu0 0.0
    %320 = vmatprep.subr.mxu0 0.0
    %321 = vmatpush2.msra.mxu0 0.0
    %322 = vmatprep.subr.mxu0 0.0
    %323 = vmatpush2.msra.mxu0 0.0
    %324 = vmatprep.subr.mxu0 0.0
    %325 = vmatpush2.msra.mxu0 0.0
    %326 = vmatprep.subr.mxu0 0.0
    %327 = vmatpush2.msra.mxu0 0.0
    %328 = vmatprep.subr.mxu0 0.0
    %329 = vmatpush2.msra.mxu0 0.0
    %330 = vmatprep.subr.mxu0 0.0
    %331 = vmatpush2.msra.mxu0 0.0
    %332 = vmatprep.subr.mxu0 0.0
    %333 = vmatpush2.msra.mxu0 0.0
    %334 = vmatprep.subr.mxu0 0.0
    %335 = vmatpush2.msra.mxu0 0.0
    %336 = vmatprep.subr.mxu0 0.0
    %337 = vmatpush2.msra.mxu0 0.0
    %338 = vmatprep.subr.mxu0 0.0
    %339 = vmatpush2.msra.mxu0 0.0
    %340 = vmatprep.subr.mxu0 0.0
    %341 = vmatpush2.msra.mxu0 0.0
    %342 = vmatprep.mubr.f32.mxu0 0.0
    %343 = vmatmul.mubr.f32.gmra.mxu0 %v253
    %v344 = vpop.f32.mrf.mxu0
    %v345 = vadd.f32 %v276, %v344
    %v346 = vpop.f32.mrf.mxu0
    %347 = vmatprep.mubr.f32.mxu0 0.0
    %348 = vmatmul.mubr.f32.gmra.mxu0 %v254
    %v349 = vpop.f32.mrf.mxu0
    %v350 = vadd.f32 %v276, %v349
    %v351 = vpop.f32.mrf.mxu0
    %352 = vdwg.mxu0
    %v353 = vmax.f32 %v345, 0.0
    %v354 = vmax.f32 %v350, 0.0
    %v355 = vld [vmem:[%s5] sm:$0xff]
    %v356 = vld [vmem:[%s5 + $0x8] sm:$0xff]
    %v357 = vld [vmem:[%s5 + $0x10] sm:$0xff]
    %v358 = vld [vmem:[%s5 + $0x18] sm:$0xff]
    %v359 = vld [vmem:[%s5 + $0x20] sm:$0xff]
    %v360 = vld [vmem:[%s5 + $0x28] sm:$0xff]
    %v361 = vld [vmem:[%s5 + $0x30] sm:$0xff]
    %v362 = vld [vmem:[%s5 + $0x38] sm:$0xff]
    %v363 = vld [vmem:[%s10] sm:$0x1]
    %v365 = vlaneseq
    %v366 = vshrl.u32 %v365, 7
    %v367 = vsub.s32 0, %v366
    %v368 = vrot.slane %v363, %v367
    %vm370 = vcmask 523264
    %v372 = vsel %vm370, %v353, 0
    %v375 = vsel %vm370, %v354, 0
    %377 = vmatprep.subr.mxu0 0.0
    %378 = vmatpush1.msra.mxu0 0.0
    %379 = vmatprep.subr.mxu0 0.0
    %380 = vmatpush1.msra.mxu0 0.0
    %381 = vmatprep.subr.mxu0 0.0
    %382 = vmatpush1.msra.mxu0 0.0
    %383 = vmatprep.subr.mxu0 0.0
    %384 = vmatpush1.msra.mxu0 0.0
    %385 = vmatprep.subr.mxu0 0.0
    %386 = vmatpush1.msra.mxu0 0.0
    %387 = vmatprep.subr.mxu0 0.0
    %388 = vmatpush1.msra.mxu0 0.0
    %389 = vmatprep.subr.mxu0 0.0
    %390 = vmatpush1.msra.mxu0 0.0
    %391 = vmatprep.subr.mxu0 0.0
    %392 = vmatpush1.msra.mxu0 0.0
    %393 = vmatprep.subr.mxu0 0.0
    %394 = vmatpush1.msra.mxu0 %v362
    %395 = vmatprep.subr.mxu0 0.0
    %396 = vmatpush1.msra.mxu0 %v361
    %397 = vmatprep.subr.mxu0 0.0
    %398 = vmatpush1.msra.mxu0 %v360
    %399 = vmatprep.subr.mxu0 0.0
    %400 = vmatpush1.msra.mxu0 %v359
    %401 = vmatprep.subr.mxu0 0.0
    %402 = vmatpush1.msra.mxu0 %v358
    %403 = vmatprep.subr.mxu0 0.0
    %404 = vmatpush1.msra.mxu0 %v357
    %405 = vmatprep.subr.mxu0 0.0
    %406 = vmatpush1.msra.mxu0 %v356
    %407 = vmatprep.subr.mxu0 0.0
    %408 = vmatpush1.msra.mxu0 %v355
    %409 = vmatprep.subr.mxu0 0.0
    %410 = vmatpush2.msra.mxu0 0.0
    %411 = vmatprep.subr.mxu0 0.0
    %412 = vmatpush2.msra.mxu0 0.0
    %413 = vmatprep.subr.mxu0 0.0
    %414 = vmatpush2.msra.mxu0 0.0
    %415 = vmatprep.subr.mxu0 0.0
    %416 = vmatpush2.msra.mxu0 0.0
    %417 = vmatprep.subr.mxu0 0.0
    %418 = vmatpush2.msra.mxu0 0.0
    %419 = vmatprep.subr.mxu0 0.0
    %420 = vmatpush2.msra.mxu0 0.0
    %421 = vmatprep.subr.mxu0 0.0
    %422 = vmatpush2.msra.mxu0 0.0
    %423 = vmatprep.subr.mxu0 0.0
    %424 = vmatpush2.msra.mxu0 0.0
    %425 = vmatprep.subr.mxu0 0.0
    %426 = vmatpush2.msra.mxu0 0.0
    %427 = vmatprep.subr.mxu0 0.0
    %428 = vmatpush2.msra.mxu0 0.0
    %429 = vmatprep.subr.mxu0 0.0
    %430 = vmatpush2.msra.mxu0 0.0
    %431 = vmatprep.subr.mxu0 0.0
    %432 = vmatpush2.msra.mxu0 0.0
    %433 = vmatprep.subr.mxu0 0.0
    %434 = vmatpush2.msra.mxu0 0.0
    %435 = vmatprep.subr.mxu0 0.0
    %436 = vmatpush2.msra.mxu0 0.0
    %437 = vmatprep.subr.mxu0 0.0
    %438 = vmatpush2.msra.mxu0 0.0
    %439 = vmatprep.subr.mxu0 0.0
    %440 = vmatpush2.msra.mxu0 0.0
    %441 = vmatprep.mubr.f32.mxu0 0.0
    %442 = vmatmul.mubr.f32.gmra.mxu0 %v372
    %v443 = vpop.f32.mrf.mxu0
    %v444 = vadd.f32 %v368, %v443
    %v445 = vpop.f32.mrf.mxu0
    %446 = vmatprep.mubr.f32.mxu0 0.0
    %447 = vmatmul.mubr.f32.gmra.mxu0 %v375
    %v448 = vpop.f32.mrf.mxu0
    %v449 = vadd.f32 %v368, %v448
    %v450 = vpop.f32.mrf.mxu0
    %451 = vdwg.mxu0
    %v452 = vmax.f32 %v444, 0.0
    %v453 = vmax.f32 %v449, 0.0
    %v454 = vld [vmem:[%s6] sm:$0xff]
    %v455 = vld [vmem:[%s6 + $0x8] sm:$0xff]
    %v456 = vld [vmem:[%s6 + $0x10] sm:$0xff]
    %v457 = vld [vmem:[%s6 + $0x18] sm:$0xff]
    %v458 = vld [vmem:[%s11] sm:$0x1]
    %v460 = vlaneseq
    %v461 = vshrl.u32 %v460, 7
    %v462 = vsub.s32 0, %v461
    %v463 = vrot.slane %v458, %v462
    %vm465 = vcmask 261120
    %v467 = vsel %vm465, %v452, 0
    %v470 = vsel %vm465, %v453, 0
    %472 = vmatprep.subr.mxu0 0.0
    %473 = vmatpush1.msra.mxu0 0.0
    %474 = vmatprep.subr.mxu0 0.0
    %475 = vmatpush1.msra.mxu0 0.0
    %476 = vmatprep.subr.mxu0 0.0
    %477 = vmatpush1.msra.mxu0 0.0
    %478 = vmatprep.subr.mxu0 0.0
    %479 = vmatpush1.msra.mxu0 0.0
    %480 = vmatprep.subr.mxu0 0.0
    %481 = vmatpush1.msra.mxu0 0.0
    %482 = vmatprep.subr.mxu0 0.0
    %483 = vmatpush1.msra.mxu0 0.0
    %484 = vmatprep.subr.mxu0 0.0
    %485 = vmatpush1.msra.mxu0 0.0
    %486 = vmatprep.subr.mxu0 0.0
    %487 = vmatpush1.msra.mxu0 0.0
    %488 = vmatprep.subr.mxu0 0.0
    %489 = vmatpush1.msra.mxu0 0.0
    %490 = vmatprep.subr.mxu0 0.0
    %491 = vmatpush1.msra.mxu0 0.0
    %492 = vmatprep.subr.mxu0 0.0
    %493 = vmatpush1.msra.mxu0 0.0
    %494 = vmatprep.subr.mxu0 0.0
    %495 = vmatpush1.msra.mxu0 0.0
    %496 = vmatprep.subr.mxu0 0.0
    %497 = vmatpush1.msra.mxu0 %v457
    %498 = vmatprep.subr.mxu0 0.0
    %499 = vmatpush1.msra.mxu0 %v456
    %500 = vmatprep.subr.mxu0 0.0
    %501 = vmatpush1.msra.mxu0 %v455
    %502 = vmatprep.subr.mxu0 0.0
    %503 = vmatpush1.msra.mxu0 %v454
    %504 = vmatprep.subr.mxu0 0.0
    %505 = vmatpush2.msra.mxu0 0.0
    %506 = vmatprep.subr.mxu0 0.0
    %507 = vmatpush2.msra.mxu0 0.0
    %508 = vmatprep.subr.mxu0 0.0
    %509 = vmatpush2.msra.mxu0 0.0
    %510 = vmatprep.subr.mxu0 0.0
    %511 = vmatpush2.msra.mxu0 0.0
    %512 = vmatprep.subr.mxu0 0.0
    %513 = vmatpush2.msra.mxu0 0.0
    %514 = vmatprep.subr.mxu0 0.0
    %515 = vmatpush2.msra.mxu0 0.0
    %516 = vmatprep.subr.mxu0 0.0
    %517 = vmatpush2.msra.mxu0 0.0
    %518 = vmatprep.subr.mxu0 0.0
    %519 = vmatpush2.msra.mxu0 0.0
    %520 = vmatprep.subr.mxu0 0.0
    %521 = vmatpush2.msra.mxu0 0.0
    %522 = vmatprep.subr.mxu0 0.0
    %523 = vmatpush2.msra.mxu0 0.0
    %524 = vmatprep.subr.mxu0 0.0
    %525 = vmatpush2.msra.mxu0 0.0
    %526 = vmatprep.subr.mxu0 0.0
    %527 = vmatpush2.msra.mxu0 0.0
    %528 = vmatprep.subr.mxu0 0.0
    %529 = vmatpush2.msra.mxu0 0.0
    %530 = vmatprep.subr.mxu0 0.0
    %531 = vmatpush2.msra.mxu0 0.0
    %532 = vmatprep.subr.mxu0 0.0
    %533 = vmatpush2.msra.mxu0 0.0
    %534 = vmatprep.subr.mxu0 0.0
    %535 = vmatpush2.msra.mxu0 0.0
    %536 = vmatprep.mubr.f32.mxu0 0.0
    %537 = vmatmul.mubr.f32.gmra.mxu0 %v467
    %v538 = vpop.f32.mrf.mxu0
    %v539 = vadd.f32 %v463, %v538
    %v540 = vpop.f32.mrf.mxu0
    %541 = vmatprep.mubr.f32.mxu0 0.0
    %542 = vmatmul.mubr.f32.gmra.mxu0 %v470
    %v543 = vpop.f32.mrf.mxu0
    %v544 = vadd.f32 %v463, %v543
    %v545 = vpop.f32.mrf.mxu0
    %546 = vdwg.mxu0
    %v547 = vsub.f32 %v539, %v544
    %v548 = vmul.f32 %v547, %v547
    %vm549 = vcmask 23552
    %v550 = vsel %vm549, %v548, 0.0
    %551 = vadd.xlane.f32.xlu0 %v550
    %v552 = vpop.xlane.xlu0 %551
    %v553 = vrsqrt.pop %v552
    %v554 = vmul.f32 %v552, %v553
    %vm555 = vcmp.eq.f32.partialorder %v552, inf
    %v556 = vsel %vm555, %v552, %v554
    %vm557 = vcmp.eq.f32.partialorder %v552, 0.0
    %v558 = vand.u32 %v552, 2147483648
    %v559 = vsel %vm557, %v558, %v556
    %vm560 = vcmask 7168
    %561 = vst.msk [vmem:[%s12] sm:$0xff] %vm560, %v559
    // Predicated region
    $region54: #{tpu_custom_call.1} parent=1 // pred_check
      _
    $region55: #{tpu_custom_call.1} parent=1 // pred_check_branch
      %563 = sbr.rel (0) target = $region57
    $region56: #{tpu_custom_call.1} parent=1 // pred_region
      _
    $region57: #{tpu_custom_call.1} parent=1 // pred_fallthru
      _
    // Predicated region
    $region58: #{tpu_custom_call.1} parent=1 // pred_check
      _
    $region59: #{tpu_custom_call.1} parent=1 // pred_check_branch
      %565 = sbr.rel (0) target = $region61
    $region60: #{tpu_custom_call.1} parent=1 // pred_region
      _
    $region61: #{tpu_custom_call.1} parent=1 // pred_fallthru
      _
    %566 = vsyncpa [#allocation3], 1

</llo_original>
